<compile_context>
chip_gen: v7x
topology: tpu7x:2x2x1
jax: 0.10.0
libtpu: 0.0.40
codegen_flags: <defaults>
</compile_context>

<pallas_src>
import jax
import jax.numpy as jnp
from jax.experimental import pallas as pl
from jax.experimental.pallas import tpu as pltpu


_LANES = 128
_TARGET_BLOCK_BYTES = 4 * 1024 * 1024  # ~4 MiB per input block (dtype-scaled rows)


def _copy_kernel(x_ref, o_ref):
    # Pure identity copy of one lane-dense VMEM tile.
    o_ref[...] = x_ref[...]


def _identity_copy_2d(x2d: jax.Array, *, block_rows: int | None = None,
                      donate: bool = False) -> jax.Array:
    """Tiled identity copy of a (M, 128) array through a Pallas kernel."""
    M, L = x2d.shape
    itemsize = jnp.dtype(x2d.dtype).itemsize

    if block_rows is None:
        # ~4 MiB per input block, rounded down to a multiple of 8 sublanes.
        tm = max(8, (_TARGET_BLOCK_BYTES // (L * itemsize)) // 8 * 8)
    else:
        tm = block_rows
    if tm >= M:
        # Full-extent row block: always layout-legal, single grid step.
        tm = M

    grid = (pl.cdiv(M, tm),)  # partial tail block is masked by Pallas

    cost = pl.CostEstimate(
        flops=0, transcendentals=0, bytes_accessed=2 * M * L * itemsize)

    extra = {}
    if donate:
        # In-place copy / buffer donation: only when the caller no longer
        # needs the original array.
        extra["input_output_aliases"] = {0: 0}

    return pl.pallas_call(
        _copy_kernel,
        out_shape=jax.ShapeDtypeStruct((M, L), x2d.dtype),
        grid=grid,
        in_specs=[pl.BlockSpec((tm, L), lambda i: (i, 0))],
        out_specs=pl.BlockSpec((tm, L), lambda i: (i, 0)),
        compiler_params=pltpu.CompilerParams(
            dimension_semantics=("parallel",),
            vmem_limit_bytes=32 * 1024 * 1024,
        ),
        cost_estimate=cost,
        **extra,
    )(x2d)


def pallas_squeeze(x: jax.Array, dim: int = -1, *, donate: bool = False) -> jax.Array:
    """Pallas equivalent of torch.Tensor.squeeze(dim=dim)."""
    ndim = x.ndim
    d = dim if dim >= 0 else dim + ndim
    if d < 0 or d >= ndim:
        raise ValueError(f"dim {dim} out of range for ndim {ndim}")

    # PyTorch semantics: if the selected dim is not of size 1, return x as-is.
    if x.shape[d] != 1:
        return x

    # The squeeze itself: metadata-only reshape in the wrapper (element order
    # is unchanged when a size-1 axis is removed). No transpose needed.
    out_shape = tuple(s for i, s in enumerate(x.shape) if i != d)

    n = x.size
    if n == 0:
        return x.reshape(out_shape)

    flat = x.reshape(-1)
    rem = n % _LANES
    if rem:
        # Rare path: pad to a lane multiple so the kernel stays lane-dense and
        # fully pipelined, then slice the valid prefix afterwards.
        flat = jnp.pad(flat, (0, _LANES - rem))

    x2d = flat.reshape(-1, _LANES)
    out2d = _identity_copy_2d(x2d, donate=donate)
    out_flat = out2d.reshape(-1)
    if rem:
        out_flat = out_flat[:n]
    return out_flat.reshape(out_shape)


if __name__ == "__main__":
    key = jax.random.PRNGKey(0)

    # Default dim=-1 squeeze: N C H 1 -> N C H.
    x = jax.random.normal(key, (2, 4, 16, 1), dtype=jnp.float32)
    y = jax.block_until_ready(pallas_squeeze(x, dim=-1))
    y_ref = jnp.squeeze(x, axis=-1)
    assert y.shape == y_ref.shape == (2, 4, 16), y.shape
    assert y.dtype == x.dtype
    assert bool(jnp.array_equal(y, y_ref)), "mismatch vs reference (dim=-1)"

    # Squeeze of a middle unit axis.
    x2 = jax.random.normal(jax.random.PRNGKey(0), (2, 1, 16, 8), dtype=jnp.float32)
    y2 = jax.block_until_ready(pallas_squeeze(x2, dim=1))
    assert y2.shape == (2, 16, 8), y2.shape
    assert bool(jnp.array_equal(y2, jnp.squeeze(x2, axis=1))), "mismatch (dim=1)"

    # Non-unit dim: PyTorch squeeze is a no-op; verify passthrough.
    z = pallas_squeeze(x, dim=1)
    assert z.shape == x.shape

    # Element count not a multiple of 128 -> pad-and-slice path.
    x3 = jax.random.normal(jax.random.PRNGKey(1), (3, 5, 7, 1), dtype=jnp.float32)
    y3 = jax.block_until_ready(pallas_squeeze(x3, dim=-1))
    assert y3.shape == (3, 5, 7), y3.shape
    assert bool(jnp.array_equal(y3, jnp.squeeze(x3, axis=-1))), "mismatch (pad path)"

    # bf16 dtype (dtype-scaled tile selection).
    x4 = jax.random.normal(jax.random.PRNGKey(2), (2, 4, 16, 1)).astype(jnp.bfloat16)
    y4 = jax.block_until_ready(pallas_squeeze(x4, dim=-1))
    assert y4.dtype == jnp.bfloat16 and y4.shape == (2, 4, 16)
    assert bool(jnp.array_equal(y4, jnp.squeeze(x4, axis=-1))), "mismatch (bf16)"

    # Exercise the cdiv grid with a masked partial tail block (small override).
    x5 = jax.random.normal(jax.random.PRNGKey(3), (20, 128), dtype=jnp.float32)
    y5 = jax.block_until_ready(_identity_copy_2d(x5, block_rows=8))  # grid=3, tail=4 rows
    assert bool(jnp.array_equal(y5, x5)), "mismatch (partial tail block)"

    print("KERNEL_OK")
</pallas_src>

<mosaic_0001>
module attributes {stable_mosaic.version = 11 : i64} {
  func.func @_copy_kernel(%arg0: i32, %arg1: memref<1x128xf32, #tpu.memory_space<vmem>>, %arg2: memref<1x128xf32, #tpu.memory_space<vmem>>) attributes {dimension_semantics = [#tpu.dimension_semantics<parallel>], iteration_bounds = array<i64: 1>, scalar_prefetch = 0 : i64, scratch_operands = 0 : i64, tpu.core_type = #tpu.core_type<tc>, window_params = [{transform_indices = @transform_0, window_bounds = array<i64: 1, 128>}, {transform_indices = @transform_1, window_bounds = array<i64: 1, 128>}]} {
    %c0 = arith.constant 0 : index
    %c0_0 = arith.constant 0 : index
    %0 = vector.load %arg1[%c0, %c0_0] : memref<1x128xf32, #tpu.memory_space<vmem>>, vector<1x128xf32>
    %c0_1 = arith.constant 0 : index
    %c0_2 = arith.constant 0 : index
    %1 = vector.load %arg2[%c0_1, %c0_2] : memref<1x128xf32, #tpu.memory_space<vmem>>, vector<1x128xf32>
    tpu.vector_store %arg2[%c0_1, %c0_2], %0 {strides = array<i32>} : memref<1x128xf32, #tpu.memory_space<vmem>>, vector<1x128xf32>,
    return
  }
  func.func @transform_0(%arg0: i32) -> (i32, i32) {
    %c0_i32 = arith.constant 0 : i32
    %c0_i32_0 = arith.constant 0 : i32
    return %arg0, %c0_i32 : i32, i32
  }
  func.func @transform_1(%arg0: i32) -> (i32, i32) {
    %c0_i32 = arith.constant 0 : i32
    %c0_i32_0 = arith.constant 0 : i32
    return %arg0, %c0_i32 : i32, i32
  }
}

</mosaic_0001>

<llo_original>
// kernel: tpu_custom_call.1
$region0: #{tpu_custom_call.1}
  #allocation0 [shape = 'u32[]', space=smem, size = 0x4, offset = 0x4, fixed_abs, tag = 'smem constant byte address 0x4 - core index']
  #allocation1 [shape = 'u32[144,128]{1,0:T(1,128)}', space=vmem, size = 0x12000, scoped, tag = 'internal scratch']
  %s0 = inlined_call_operand.hbm [shape: f32[1,128], index: 0, kind: input, shape index: {}]
  %s1 = inlined_call_operand.hbm [shape: f32[1,128], index: 1, kind: output, shape index: {}]
  %s2 = sld [smem:[#allocation0]]
  $region18: #{tpu_custom_call.1} parent=0
    _
  %s4 = ssub.s32 1, %s2
  %s5 = scalar_select 0, %s4, %s2
  $region1: #{tpu_custom_call.1} parent=0
    #allocation2 [shape = 'u8[512]{0}', space=vmem, size = 0x400, scoped, tag = 'input window, operand 0, single buffered']
    #allocation3 [shape = 's32[1]{0}', space=sflag, size = 0x4, scoped, tag = 'scoped memory for tpu_custom_call.1']
    #allocation4 [shape = 's32[1]{0}', space=sflag, size = 0x4, scoped, tag = 'scoped memory for tpu_custom_call.1']
    #allocation5 [shape = 'u8[512]{0}', space=vmem, size = 0x400, scoped, tag = 'output window, operand 0, single buffered']
    %6 = vsyncpa [#allocation3], 0
    %7 = vsyncpa [#allocation4], 0
    // Predicated region
    $region2: #{tpu_custom_call.1} parent=1 // pred_check
      _
    $region3: #{tpu_custom_call.1} parent=1 // pred_check_branch
      %9 = sbr.rel (0) target = $region5
    $region4: #{tpu_custom_call.1} parent=1 // pred_region
      %s11 = ssub.s32 16, 16
      %12 = vsyncadd [#allocation3], %s11
      %s14 = sshll.u32 [#allocation2], 4
      %s15 = int_to_ptr.vmem [resolvable:$true] %s14
      %17 = dma.hbm_to_vmem [thread:$0]  %s0, 16, %s15, [#allocation3]
    $region5: #{tpu_custom_call.1} parent=1 // pred_fallthru
      _
    // Predicated region
    $region6: #{tpu_custom_call.1} parent=1 // pred_check
      _
    $region7: #{tpu_custom_call.1} parent=1 // pred_check_branch
      %19 = sbr.rel (0) target = $region9
    $region8: #{tpu_custom_call.1} parent=1 // pred_region
      %20 = dma.done [#allocation3], 16
    $region9: #{tpu_custom_call.1} parent=1 // pred_fallthru
      _
    %v21 = vld [vmem:[#allocation2] sm:$0x1]
    %22 = vst [vmem:[#allocation5] sm:$0x1] %v21
    // Predicated region
    $region10: #{tpu_custom_call.1} parent=1 // pred_check
      _
    $region11: #{tpu_custom_call.1} parent=1 // pred_check_branch
      %24 = sbr.rel (0) target = $region13
    $region12: #{tpu_custom_call.1} parent=1 // pred_region
      %s26 = ssub.s32 16, 16
      %27 = vsyncadd [#allocation4], %s26
      %s29 = sshll.u32 [#allocation5], 4
      %s30 = int_to_ptr.vmem [resolvable:$true] %s29
      %32 = dma.vmem_to_hbm [thread:$0]  %s30, 16, %s1, [#allocation4]
    $region13: #{tpu_custom_call.1} parent=1 // pred_fallthru
      _
    // Predicated region
    $region14: #{tpu_custom_call.1} parent=1 // pred_check
      _
    $region15: #{tpu_custom_call.1} parent=1 // pred_check_branch
      %34 = sbr.rel (0) target = $region17
    $region16: #{tpu_custom_call.1} parent=1 // pred_region
      %35 = dma.done [#allocation4], 16
    $region17: #{tpu_custom_call.1} parent=1 // pred_fallthru
      _
    %36 = vsyncpa [#allocation3], 1
    %37 = vsyncpa [#allocation4], 1

</llo_original>
